<compile_context>
chip_gen: v7x
topology: tpu7x:2x2x1
jax: 0.10.0
libtpu: 0.0.40
codegen_flags: <defaults>
</compile_context>

<pallas_src>
import functools

import jax
import jax.numpy as jnp
from jax.experimental import pallas as pl
from jax.experimental.pallas import tpu as pltpu

LANES = 128


def _round_up(x, m):
    return ((x + m - 1) // m) * m


def mlp_kernel(x_ref, w1_ref, w2_ref, o_ref):
    """x_ref: (in_sz, TR, 128) VMEM, w1_ref: (in_sz, hid) SMEM,
    w2_ref: (hid, 1) SMEM, o_ref: (TR, 128) VMEM."""
    in_sz, hid_sz = w1_ref.shape

    # Load each input feature plane once; fully packed (TR, 128) f32 slabs.
    xs = [x_ref[k] for k in range(in_sz)]          # static unroll (in_sz = 2)

    acc = None
    for j in range(hid_sz):                        # static unroll (hid_sz = 3)
        # z_j = sum_k x_k * W1[k, j]  (VPU FMAs with SMEM scalar splats)
        z = xs[0] * w1_ref[0, j]
        for k in range(1, in_sz):
            z = z + xs[k] * w1_ref[k, j]
        # sigmoid via a single EUP tanh:  sigmoid(z) = 0.5*(1 + tanh(z/2))
        h = 0.5 * (1.0 + jnp.tanh(0.5 * z))
        t = h * w2_ref[j, 0]
        acc = t if acc is None else acc + t

    # Output sigmoid; fully lane/sublane-dense store.
    o_ref[...] = 0.5 * (1.0 + jnp.tanh(0.5 * acc))


@functools.partial(jax.jit, static_argnames=("tile_rows",))
def neural_network_forward(X, W1, W2, *, tile_rows=1024):
    """Forward pass matching Neural_Network.forward.

    X : (N, 2) float32, W1: (2, 3) float32, W2: (3, 1) float32 -> (N, 1) float32
    tile_rows = rows of 128 lanes per grid step (1024 -> ~1 MiB of X per step).
    """
    N, in_sz = X.shape
    hid_sz = W1.shape[1]
    out_sz = W2.shape[1]
    assert out_sz == 1, "lane-dense output layout assumes outputSize == 1"

    # Pad the batch only to the 128-lane granularity (not to the tile size).
    Np = _round_up(max(N, 1), LANES)
    R = Np // LANES

    Xp = X if Np == N else jnp.pad(X, ((0, Np - N), (0, 0)))  # fused under jit
    # Lane-dense input: X3[k, r, l] = X[r*128 + l, k]
    X3 = Xp.T.reshape(in_sz, R, LANES)

    # Batch tile: TR rows of 128 lanes. Full extent if small, else a multiple
    # of 8 sublanes; partial last block handled by the cdiv grid.
    TR = R if R <= tile_rows else _round_up(tile_rows, 8)
    grid = (pl.cdiv(R, TR),)

    out2 = pl.pallas_call(
        mlp_kernel,
        out_shape=jax.ShapeDtypeStruct((R, LANES), jnp.float32),
        grid=grid,
        in_specs=[
            # X: batch-tiled, fully dense (sublanes x lanes) blocks.
            pl.BlockSpec((in_sz, TR, LANES), lambda i: (0, i, 0)),
            # Tiny weights as SMEM scalars (resident for the whole call).
            pl.BlockSpec(memory_space=pltpu.MemorySpace.SMEM),
            pl.BlockSpec(memory_space=pltpu.MemorySpace.SMEM),
        ],
        out_specs=pl.BlockSpec((TR, LANES), lambda i: (i, 0)),
        compiler_params=pltpu.CompilerParams(
            dimension_semantics=("parallel",),   # batch axis: megacore-shardable
        ),
        cost_estimate=pl.CostEstimate(
            flops=22 * Np, transcendentals=4 * Np, bytes_accessed=12 * Np),
    )(X3, W1, W2)

    # (R,128) -> (Np,) is a free row-major reshape; slice off lane padding.
    return out2.reshape(Np, 1)[:N]


if __name__ == "__main__":
    key = jax.random.PRNGKey(0)
    k_x, k_w1, k_w2 = jax.random.split(key, 3)

    input_size, hidden_size, output_size = 2, 3, 1
    batch = 4  # small batch of (hours sleep, hours study)-style rows

    # Deterministic synthetic inputs / weights (torch.randn analogue).
    X_raw = jnp.abs(jax.random.normal(k_x, (batch, input_size), jnp.float32)) * 10.0
    W1 = jax.random.normal(k_w1, (input_size, hidden_size), jnp.float32)
    W2 = jax.random.normal(k_w2, (hidden_size, output_size), jnp.float32)

    # Mirror the script-level preprocessing: X = X / X_max (per-column max).
    X = X_raw / jnp.max(X_raw, axis=0, keepdims=True)

    out = neural_network_forward(X, W1, W2)
    out = jax.block_until_ready(out)

    # Pure-JAX reference check (exact sigmoid; kernel uses the EUP tanh form,
    # so allow a small absolute tolerance on values in (0,1)).
    ref = 1.0 / (1.0 + jnp.exp(-(1.0 / (1.0 + jnp.exp(-(X @ W1)))) @ W2))
    assert out.shape == (batch, output_size)
    assert jnp.allclose(out, ref, atol=2e-3, rtol=0.0), (out, ref)

    # TODO(synk): backward/train/saveWeights/predict (training loop + torch.save
    # + prints) are out of scope for a forward-pass Pallas kernel.

    print("KERNEL_OK")
</pallas_src>

<mosaic_0001>
module attributes {stable_mosaic.version = 11 : i64} {
  func.func @mlp_kernel(%arg0: i32, %arg1: memref<2x1x128xf32, #tpu.memory_space<vmem>>, %arg2: memref<2x3xf32, #tpu.memory_space<smem>>, %arg3: memref<3x1xf32, #tpu.memory_space<smem>>, %arg4: memref<1x128xf32, #tpu.memory_space<vmem>>) attributes {dimension_semantics = [#tpu.dimension_semantics<parallel>], iteration_bounds = array<i64: 1>, scalar_prefetch = 0 : i64, scratch_operands = 0 : i64, tpu.core_type = #tpu.core_type<tc>, window_params = [{transform_indices = @transform_0, window_bounds = array<i64: 2, 1, 128>}, {transform_indices = @transform_1, window_bounds = array<i64: 2, 3>}, {transform_indices = @transform_2, window_bounds = array<i64: 3, 1>}, {transform_indices = @transform_3, window_bounds = array<i64: 1, 128>}]} {
    %c0 = arith.constant 0 : index
    %c0_0 = arith.constant 0 : index
    %c0_1 = arith.constant 0 : index
    %0 = vector.load %arg1[%c0, %c0_0, %c0_1] : memref<2x1x128xf32, #tpu.memory_space<vmem>>, vector<1x1x128xf32>
    %1 = vector.shape_cast %0 : vector<1x1x128xf32> to vector<1x128xf32>
    %c1 = arith.constant 1 : index
    %c0_2 = arith.constant 0 : index
    %c0_3 = arith.constant 0 : index
    %2 = vector.load %arg1[%c1, %c0_2, %c0_3] : memref<2x1x128xf32, #tpu.memory_space<vmem>>, vector<1x1x128xf32>
    %3 = vector.shape_cast %2 : vector<1x1x128xf32> to vector<1x128xf32>
    %c0_4 = arith.constant 0 : index
    %c0_5 = arith.constant 0 : index
    %4 = memref.load %arg2[%c0_4, %c0_5] : memref<2x3xf32, #tpu.memory_space<smem>>
    %5 = vector.broadcast %4 : f32 to vector<1x128xf32>
    %6 = arith.mulf %1, %5 : vector<1x128xf32>
    %c1_6 = arith.constant 1 : index
    %c0_7 = arith.constant 0 : index
    %7 = memref.load %arg2[%c1_6, %c0_7] : memref<2x3xf32, #tpu.memory_space<smem>>
    %8 = vector.broadcast %7 : f32 to vector<1x128xf32>
    %9 = arith.mulf %3, %8 : vector<1x128xf32>
    %10 = arith.addf %6, %9 : vector<1x128xf32>
    %cst = arith.constant 5.000000e-01 : f32
    %11 = vector.broadcast %cst : f32 to vector<1x128xf32>
    %12 = arith.mulf %11, %10 : vector<1x128xf32>
    %13 = math.tanh %12 : vector<1x128xf32>
    %cst_8 = arith.constant 1.000000e+00 : f32
    %14 = vector.broadcast %cst_8 : f32 to vector<1x128xf32>
    %15 = arith.addf %14, %13 : vector<1x128xf32>
    %cst_9 = arith.constant 5.000000e-01 : f32
    %16 = vector.broadcast %cst_9 : f32 to vector<1x128xf32>
    %17 = arith.mulf %16, %15 : vector<1x128xf32>
    %c0_10 = arith.constant 0 : index
    %c0_11 = arith.constant 0 : index
    %18 = memref.load %arg3[%c0_10, %c0_11] : memref<3x1xf32, #tpu.memory_space<smem>>
    %19 = vector.broadcast %18 : f32 to vector<1x128xf32>
    %20 = arith.mulf %17, %19 : vector<1x128xf32>
    %c0_12 = arith.constant 0 : index
    %c1_13 = arith.constant 1 : index
    %21 = memref.load %arg2[%c0_12, %c1_13] : memref<2x3xf32, #tpu.memory_space<smem>>
    %22 = vector.broadcast %21 : f32 to vector<1x128xf32>
    %23 = arith.mulf %1, %22 : vector<1x128xf32>
    %c1_14 = arith.constant 1 : index
    %c1_15 = arith.constant 1 : index
    %24 = memref.load %arg2[%c1_14, %c1_15] : memref<2x3xf32, #tpu.memory_space<smem>>
    %25 = vector.broadcast %24 : f32 to vector<1x128xf32>
    %26 = arith.mulf %3, %25 : vector<1x128xf32>
    %27 = arith.addf %23, %26 : vector<1x128xf32>
    %cst_16 = arith.constant 5.000000e-01 : f32
    %28 = vector.broadcast %cst_16 : f32 to vector<1x128xf32>
    %29 = arith.mulf %28, %27 : vector<1x128xf32>
    %30 = math.tanh %29 : vector<1x128xf32>
    %cst_17 = arith.constant 1.000000e+00 : f32
    %31 = vector.broadcast %cst_17 : f32 to vector<1x128xf32>
    %32 = arith.addf %31, %30 : vector<1x128xf32>
    %cst_18 = arith.constant 5.000000e-01 : f32
    %33 = vector.broadcast %cst_18 : f32 to vector<1x128xf32>
    %34 = arith.mulf %33, %32 : vector<1x128xf32>
    %c1_19 = arith.constant 1 : index
    %c0_20 = arith.constant 0 : index
    %35 = memref.load %arg3[%c1_19, %c0_20] : memref<3x1xf32, #tpu.memory_space<smem>>
    %36 = vector.broadcast %35 : f32 to vector<1x128xf32>
    %37 = arith.mulf %34, %36 : vector<1x128xf32>
    %38 = arith.addf %20, %37 : vector<1x128xf32>
    %c0_21 = arith.constant 0 : index
    %c2 = arith.constant 2 : index
    %39 = memref.load %arg2[%c0_21, %c2] : memref<2x3xf32, #tpu.memory_space<smem>>
    %40 = vector.broadcast %39 : f32 to vector<1x128xf32>
    %41 = arith.mulf %1, %40 : vector<1x128xf32>
    %c1_22 = arith.constant 1 : index
    %c2_23 = arith.constant 2 : index
    %42 = memref.load %arg2[%c1_22, %c2_23] : memref<2x3xf32, #tpu.memory_space<smem>>
    %43 = vector.broadcast %42 : f32 to vector<1x128xf32>
    %44 = arith.mulf %3, %43 : vector<1x128xf32>
    %45 = arith.addf %41, %44 : vector<1x128xf32>
    %cst_24 = arith.constant 5.000000e-01 : f32
    %46 = vector.broadcast %cst_24 : f32 to vector<1x128xf32>
    %47 = arith.mulf %46, %45 : vector<1x128xf32>
    %48 = math.tanh %47 : vector<1x128xf32>
    %cst_25 = arith.constant 1.000000e+00 : f32
    %49 = vector.broadcast %cst_25 : f32 to vector<1x128xf32>
    %50 = arith.addf %49, %48 : vector<1x128xf32>
    %cst_26 = arith.constant 5.000000e-01 : f32
    %51 = vector.broadcast %cst_26 : f32 to vector<1x128xf32>
    %52 = arith.mulf %51, %50 : vector<1x128xf32>
    %c2_27 = arith.constant 2 : index
    %c0_28 = arith.constant 0 : index
    %53 = memref.load %arg3[%c2_27, %c0_28] : memref<3x1xf32, #tpu.memory_space<smem>>
    %54 = vector.broadcast %53 : f32 to vector<1x128xf32>
    %55 = arith.mulf %52, %54 : vector<1x128xf32>
    %56 = arith.addf %38, %55 : vector<1x128xf32>
    %cst_29 = arith.constant 5.000000e-01 : f32
    %57 = vector.broadcast %cst_29 : f32 to vector<1x128xf32>
    %58 = arith.mulf %57, %56 : vector<1x128xf32>
    %59 = math.tanh %58 : vector<1x128xf32>
    %cst_30 = arith.constant 1.000000e+00 : f32
    %60 = vector.broadcast %cst_30 : f32 to vector<1x128xf32>
    %61 = arith.addf %60, %59 : vector<1x128xf32>
    %cst_31 = arith.constant 5.000000e-01 : f32
    %62 = vector.broadcast %cst_31 : f32 to vector<1x128xf32>
    %63 = arith.mulf %62, %61 : vector<1x128xf32>
    %c0_32 = arith.constant 0 : index
    %c0_33 = arith.constant 0 : index
    %64 = vector.load %arg4[%c0_32, %c0_33] : memref<1x128xf32, #tpu.memory_space<vmem>>, vector<1x128xf32>
    tpu.vector_store %arg4[%c0_32, %c0_33], %63 {strides = array<i32>} : memref<1x128xf32, #tpu.memory_space<vmem>>, vector<1x128xf32>,
    return
  }
  func.func @transform_0(%arg0: i32) -> (i32, i32, i32) {
    %c0_i32 = arith.constant 0 : i32
    %c0_i32_0 = arith.constant 0 : i32
    %c0_i32_1 = arith.constant 0 : i32
    return %c0_i32, %arg0, %c0_i32_0 : i32, i32, i32
  }
  func.func @transform_1(%arg0: i32) -> (i32, i32) {
    %c0_i32 = arith.constant 0 : i32
    %c0_i32_0 = arith.constant 0 : i32
    %c0_i32_1 = arith.constant 0 : i32
    return %c0_i32, %c0_i32_0 : i32, i32
  }
  func.func @transform_2(%arg0: i32) -> (i32, i32) {
    %c0_i32 = arith.constant 0 : i32
    %c0_i32_0 = arith.constant 0 : i32
    %c0_i32_1 = arith.constant 0 : i32
    return %c0_i32, %c0_i32_0 : i32, i32
  }
  func.func @transform_3(%arg0: i32) -> (i32, i32) {
    %c0_i32 = arith.constant 0 : i32
    %c0_i32_0 = arith.constant 0 : i32
    return %arg0, %c0_i32 : i32, i32
  }
}

</mosaic_0001>

<llo_original>
// kernel: neural_network_forward.1
$region0: #{neural_network_forward.1}
  #allocation0 [shape = 'u32[]', space=smem, size = 0x4, offset = 0x4, fixed_abs, tag = 'smem constant byte address 0x4 - core index']
  #allocation1 [shape = 'u32[144,128]{1,0:T(1,128)}', space=vmem, size = 0x12000, scoped, tag = 'internal scratch']
  %s0 = inlined_call_operand.vmem [shape: f32[2,1,128], index: 0, kind: input, shape index: {}]
  %s1 = inlined_call_operand.vmem [shape: f32[2,3], index: 1, kind: input, shape index: {}]
  %s2 = inlined_call_operand.vmem [shape: f32[3,1], index: 2, kind: input, shape index: {}]
  %s3 = inlined_call_operand.vmem [shape: f32[1,128], index: 3, kind: output, shape index: {}]
  %s4 = sld [smem:[#allocation0]]
  $region30: #{neural_network_forward.1} parent=0
    _
  %s6 = ssub.s32 1, %s4
  %s7 = scalar_select 0, %s6, %s4
  $region1: #{neural_network_forward.1} parent=0
    #allocation2 [shape = 'u8[1024]{0}', space=smem, size = 0x400, scoped, tag = 'input window, operand 1, single buffered']
    #allocation3 [shape = 's32[1]{0}', space=sflag, size = 0x4, scoped, tag = 'scoped memory for neural_network_forward.1']
    #allocation4 [shape = 'u8[2048]{0}', space=smem, size = 0x800, scoped, tag = 'input window, operand 2, single buffered']
    #allocation5 [shape = 's32[1]{0}', space=sflag, size = 0x4, scoped, tag = 'scoped memory for neural_network_forward.1']
    %8 = vsyncpa [#allocation3], 0
    %9 = vsyncpa [#allocation5], 0
    // Predicated region
    $region2: #{neural_network_forward.1} parent=1 // pred_check
      _
    $region3: #{neural_network_forward.1} parent=1 // pred_check_branch
      %11 = sbr.rel (0) target = $region5
    $region4: #{neural_network_forward.1} parent=1 // pred_region
      _
    $region5: #{neural_network_forward.1} parent=1 // pred_fallthru
      _
    // Predicated region
    $region6: #{neural_network_forward.1} parent=1 // pred_check
      _
    $region7: #{neural_network_forward.1} parent=1 // pred_check_branch
      %13 = sbr.rel (0) target = $region9
    $region8: #{neural_network_forward.1} parent=1 // pred_region
      %s15 = ssub.s32 32, 32
      %16 = vsyncadd [#allocation3], %s15
      %s18 = sshll.u32 %s1, 4
      %s19 = int_to_ptr.vmem [resolvable:$true] %s18
      %21 = dma.vmem_to_smem %s19, 32, [#allocation2], [#allocation3]
    $region9: #{neural_network_forward.1} parent=1 // pred_fallthru
      _
    // Predicated region
    $region10: #{neural_network_forward.1} parent=1 // pred_check
      _
    $region11: #{neural_network_forward.1} parent=1 // pred_check_branch
      %23 = sbr.rel (0) target = $region13
    $region12: #{neural_network_forward.1} parent=1 // pred_region
      %s25 = ssub.s32 64, 64
      %26 = vsyncadd [#allocation5], %s25
      %s28 = sshll.u32 %s2, 4
      %s29 = int_to_ptr.vmem [resolvable:$true] %s28
      %31 = dma.vmem_to_smem %s29, 64, [#allocation4], [#allocation5]
    $region13: #{neural_network_forward.1} parent=1 // pred_fallthru
      _
    // Predicated region
    $region14: #{neural_network_forward.1} parent=1 // pred_check
      _
    $region15: #{neural_network_forward.1} parent=1 // pred_check_branch
      %33 = sbr.rel (0) target = $region17
    $region16: #{neural_network_forward.1} parent=1 // pred_region
      %34 = dma.done [#allocation3], 32
    $region17: #{neural_network_forward.1} parent=1 // pred_fallthru
      _
    // Predicated region
    $region18: #{neural_network_forward.1} parent=1 // pred_check
      _
    $region19: #{neural_network_forward.1} parent=1 // pred_check_branch
      %36 = sbr.rel (0) target = $region21
    $region20: #{neural_network_forward.1} parent=1 // pred_region
      %37 = dma.done [#allocation5], 64
    $region21: #{neural_network_forward.1} parent=1 // pred_fallthru
      _
    %38 = sfence
    %v39 = vld [vmem:[%s0] sm:$0x1]
    %s40 = scalar_lea.vmem %s0, 1
    %v41 = vld [vmem:[%s40] sm:$0x1]
    %s42 = sld [smem:[#allocation2]]
    %v43 = vstv %s42
    %v44 = vmul.f32 %v39, %v43
    %s45 = sld [smem:[#allocation2 + $0x80]]
    %v46 = vstv %s45
    %v47 = vmul.f32 %v41, %v46
    %v48 = vadd.f32 %v44, %v47
    %v49 = vmul.f32 %v48, 0.5
    %v50 = vtanh.pop %v49
    %v51 = vadd.f32 %v50, 1.0
    %v52 = vmul.f32 %v51, 0.5
    %s53 = sld [smem:[#allocation4]]
    %v54 = vstv %s53
    %v55 = vmul.f32 %v52, %v54
    %s56 = sld [smem:[#allocation2 + $0x1]]
    %v57 = vstv %s56
    %v58 = vmul.f32 %v39, %v57
    %s59 = sld [smem:[#allocation2 + $0x81]]
    %v60 = vstv %s59
    %v61 = vmul.f32 %v41, %v60
    %v62 = vadd.f32 %v58, %v61
    %v63 = vmul.f32 %v62, 0.5
    %v64 = vtanh.pop %v63
    %v65 = vadd.f32 %v64, 1.0
    %v66 = vmul.f32 %v65, 0.5
    %s67 = sld [smem:[#allocation4 + $0x80]]
    %v68 = vstv %s67
    %v69 = vmul.f32 %v66, %v68
    %v70 = vadd.f32 %v55, %v69
    %s71 = sld [smem:[#allocation2 + $0x2]]
    %v72 = vstv %s71
    %v73 = vmul.f32 %v39, %v72
    %s74 = sld [smem:[#allocation2 + $0x82]]
    %v75 = vstv %s74
    %v76 = vmul.f32 %v41, %v75
    %v77 = vadd.f32 %v73, %v76
    %v78 = vmul.f32 %v77, 0.5
    %v79 = vtanh.pop %v78
    %v80 = vadd.f32 %v79, 1.0
    %v81 = vmul.f32 %v80, 0.5
    %s82 = sld [smem:[#allocation4 + $0x100]]
    %v83 = vstv %s82
    %v84 = vmul.f32 %v81, %v83
    %v85 = vadd.f32 %v70, %v84
    %v86 = vmul.f32 %v85, 0.5
    %v87 = vtanh.pop %v86
    %v88 = vadd.f32 %v87, 1.0
    %v89 = vmul.f32 %v88, 0.5
    %90 = vst [vmem:[%s3] sm:$0x1] %v89
    // Predicated region
    $region22: #{neural_network_forward.1} parent=1 // pred_check
      _
    $region23: #{neural_network_forward.1} parent=1 // pred_check_branch
      %92 = sbr.rel (0) target = $region25
    $region24: #{neural_network_forward.1} parent=1 // pred_region
      _
    $region25: #{neural_network_forward.1} parent=1 // pred_fallthru
      _
    // Predicated region
    $region26: #{neural_network_forward.1} parent=1 // pred_check
      _
    $region27: #{neural_network_forward.1} parent=1 // pred_check_branch
      %94 = sbr.rel (0) target = $region29
    $region28: #{neural_network_forward.1} parent=1 // pred_region
      _
    $region29: #{neural_network_forward.1} parent=1 // pred_fallthru
      _
    %95 = vsyncpa [#allocation3], 1
    %96 = vsyncpa [#allocation5], 1

</llo_original>
